<compile_context>
chip_gen: v7x
topology: tpu7x:2x2x1
jax: 0.10.0
libtpu: 0.0.40
codegen_flags: <defaults>
</compile_context>

<pallas_src>
import functools

import jax
import jax.numpy as jnp
from jax import lax
from jax.experimental import pallas as pl
from jax.experimental.pallas import tpu as pltpu


# --------------------------------------------------------------------------
# Kernel
# --------------------------------------------------------------------------
def _kd_sums_kernel(s1_ref, s2_ref, kl_ref, l1_ref, kl_acc, l1_acc, *,
                    inv_temp, n_rows, row_tile, mask_rows):
    """One grid step processes a (TN, L) tile of rows.

    kl_acc / l1_acc: (1, L) f32 VMEM lane-partial accumulators persisting
                     across the grid (cross-lane collapse deferred).
    kl_ref / l1_ref: (1, 1) SMEM scalar outputs, written only on the last step.
    """
    i = pl.program_id(0)

    @pl.when(i == 0)
    def _():
        kl_acc[...] = jnp.zeros_like(kl_acc)
        l1_acc[...] = jnp.zeros_like(l1_acc)

    s1 = s1_ref[...].astype(jnp.float32)            # (TN, L)
    s2 = s2_ref[...].astype(jnp.float32)            # (TN, L)

    if mask_rows:
        # Ragged last tile: rows past n_rows hold unspecified data.  Zeroing
        # BOTH inputs makes those rows exactly loss-neutral: identical
        # (uniform) softmax distributions -> KL term 0, and |0-0| == 0.
        row_ids = i * row_tile + lax.broadcasted_iota(jnp.int32, s1.shape, 0)
        valid = row_ids < n_rows
        s1 = jnp.where(valid, s1, 0.0)
        s2 = jnp.where(valid, s2, 0.0)

    x1 = s1 * inv_temp
    x2 = s2 * inv_temp

    # Numerically stable softmax / log_softmax along the feature axis.
    m1 = jnp.max(x1, axis=-1, keepdims=True)
    e1 = jnp.exp(x1 - m1)
    z1 = jnp.sum(e1, axis=-1, keepdims=True)
    logp1 = (x1 - m1) - jnp.log(z1)                 # log_softmax(S1/T)
    p1 = e1 / z1                                    # softmax(S1/T)

    m2 = jnp.max(x2, axis=-1, keepdims=True)
    e2 = jnp.exp(x2 - m2)
    z2 = jnp.sum(e2, axis=-1, keepdims=True)
    logq2 = (x2 - m2) - jnp.log(z2)                 # log_softmax(S2/T)

    kl_pt = p1 * (logp1 - logq2)                    # KL(p1 || q2) pointwise
    l1_pt = jnp.abs(s2 - s1)                        # |S2 - S1| pointwise

    # Row-axis (sublane) reduction = plain vreg adds; keep lane partials.
    kl_acc[...] += jnp.sum(kl_pt, axis=0, keepdims=True)
    l1_acc[...] += jnp.sum(l1_pt, axis=0, keepdims=True)

    @pl.when(i == pl.num_programs(0) - 1)
    def _():
        kl_ref[0, 0] = jnp.sum(kl_acc[...])
        l1_ref[0, 0] = jnp.sum(l1_acc[...])


# --------------------------------------------------------------------------
# pallas_call wrapper
# --------------------------------------------------------------------------
_MAX_TILE_ELEMS = 512 * 1024          # ~2 MiB f32 per input tile (per buffer)


def _choose_row_tile(n, l):
    # VMEM stores rows lane-padded to a multiple of 128; budget accordingly.
    l_pad = ((max(l, 1) + 127) // 128) * 128
    tn = _MAX_TILE_ELEMS // l_pad
    tn = max(8, (tn // 8) * 8)
    if n <= tn:
        return n                      # single tile == full array dim (legal)
    return tn


@functools.partial(jax.jit, static_argnames=("temperature",))
def _kd_partial_sums(s1, s2, temperature):
    """(N, L) x2 -> (kl_sum, l1_sum) f32 scalars (un-normalized)."""
    n, l = s1.shape
    tn = _choose_row_tile(n, l)
    num_tiles = (n + tn - 1) // tn
    mask_rows = (n % tn) != 0         # ragged last tile handled in-kernel

    kernel = functools.partial(
        _kd_sums_kernel,
        inv_temp=1.0 / float(temperature),
        n_rows=n, row_tile=tn, mask_rows=mask_rows)

    smem_scalar = pl.BlockSpec((1, 1), lambda i: (0, 0),
                               memory_space=pltpu.SMEM)

    kl_sum, l1_sum = pl.pallas_call(
        kernel,
        out_shape=(jax.ShapeDtypeStruct((1, 1), jnp.float32),
                   jax.ShapeDtypeStruct((1, 1), jnp.float32)),
        grid=(num_tiles,),
        in_specs=[pl.BlockSpec((tn, l), lambda i: (i, 0)),
                  pl.BlockSpec((tn, l), lambda i: (i, 0))],
        out_specs=(smem_scalar, smem_scalar),
        scratch_shapes=[pltpu.VMEM((1, l), jnp.float32),
                        pltpu.VMEM((1, l), jnp.float32)],
        compiler_params=pltpu.CompilerParams(
            dimension_semantics=("arbitrary",),
            vmem_limit_bytes=32 * 1024 * 1024),
    )(s1, s2)
    return kl_sum[0, 0], l1_sum[0, 0]


# --------------------------------------------------------------------------
# Module-equivalent wrapper (forward only)
# --------------------------------------------------------------------------
class KDLoss:
    """JAX/Pallas port of KDLoss (forward only; .detach() is a no-op here)."""

    def __init__(self, loss_weight=1.0, temperature=0.15):
        self.loss_weight = float(loss_weight)
        self.temperature = float(temperature)

    def __call__(self, S1_fea, S2_fea):
        # S1_fea / S2_fea: (N, L)
        n, l = S1_fea.shape
        kl_sum, l1_sum = _kd_partial_sums(S1_fea, S2_fea, self.temperature)
        loss_kd_dis = kl_sum / jnp.float32(n)        # kl_div 'batchmean'
        loss_kd_abs = l1_sum / jnp.float32(n * l)    # L1Loss mean
        return self.loss_weight * loss_kd_dis + self.loss_weight * loss_kd_abs


# --------------------------------------------------------------------------
# Pure-JAX reference (sanity check)
# --------------------------------------------------------------------------
def _reference_kd(s1, s2, loss_weight=1.0, temperature=0.15):
    x1 = s1 / temperature
    x2 = s2 / temperature
    p1 = jax.nn.softmax(x1, axis=1)
    logp1 = jax.nn.log_softmax(x1, axis=1)
    logq2 = jax.nn.log_softmax(x2, axis=1)
    n = s1.shape[0]
    kl = jnp.sum(p1 * (logp1 - logq2)) / n           # F.kl_div 'batchmean'
    l1 = jnp.mean(jnp.abs(s2 - s1))                  # nn.L1Loss()
    return loss_weight * kl + loss_weight * l1


if __name__ == "__main__":
    key = jax.random.PRNGKey(0)
    k1, k2 = jax.random.split(key)

    # Small (N, L) feature vectors consistent with the module's forward.
    N, L = 2, 32
    s1 = jax.random.normal(k1, (N, L), dtype=jnp.float32)
    s2 = jax.random.normal(k2, (N, L), dtype=jnp.float32)

    loss_fn = KDLoss(loss_weight=1.0, temperature=0.15)
    loss = jax.block_until_ready(loss_fn(s1, s2))

    ref = _reference_kd(s1, s2, 1.0, 0.15)
    assert jnp.allclose(loss, ref, rtol=1e-4, atol=1e-5), (loss, ref)

    print("KERNEL_OK")
</pallas_src>

<mosaic_0001>
module attributes {stable_mosaic.version = 11 : i64} {
  func.func @_kd_sums_kernel(%arg0: i32, %arg1: memref<2x32xf32, #tpu.memory_space<vmem>>, %arg2: memref<2x32xf32, #tpu.memory_space<vmem>>, %arg3: memref<1x1xf32, #tpu.memory_space<smem>>, %arg4: memref<1x1xf32, #tpu.memory_space<smem>>, %arg5: memref<1x32xf32, #tpu.memory_space<vmem>>, %arg6: memref<1x32xf32, #tpu.memory_space<vmem>>) attributes {dimension_semantics = [#tpu.dimension_semantics<arbitrary>], iteration_bounds = array<i64: 1>, scalar_prefetch = 0 : i64, scratch_operands = 2 : i64, tpu.core_type = #tpu.core_type<tc>, window_params = [{transform_indices = @transform_0, window_bounds = array<i64: 2, 32>}, {transform_indices = @transform_1, window_bounds = array<i64: 2, 32>}, {transform_indices = @transform_2, window_bounds = array<i64: 1, 1>}, {transform_indices = @transform_3, window_bounds = array<i64: 1, 1>}]} {
    %c0_i32 = arith.constant 0 : i32
    %0 = arith.cmpi eq, %arg0, %c0_i32 : i32
    %1 = arith.extui %0 : i1 to i32
    %c0_i32_0 = arith.constant 0 : i32
    %2 = arith.cmpi ne, %1, %c0_i32_0 : i32
    scf.if %2 {
      %cst_21 = arith.constant 0.000000e+00 : f32
      %52 = vector.broadcast %cst_21 : f32 to vector<1x32xf32>
      %c0_22 = arith.constant 0 : index
      %c0_23 = arith.constant 0 : index
      %53 = vector.load %arg5[%c0_22, %c0_23] : memref<1x32xf32, #tpu.memory_space<vmem>>, vector<1x32xf32>
      tpu.vector_store %arg5[%c0_22, %c0_23], %52 {strides = array<i32>} : memref<1x32xf32, #tpu.memory_space<vmem>>, vector<1x32xf32>,
      %cst_24 = arith.constant 0.000000e+00 : f32
      %54 = vector.broadcast %cst_24 : f32 to vector<1x32xf32>
      %c0_25 = arith.constant 0 : index
      %c0_26 = arith.constant 0 : index
      %55 = vector.load %arg6[%c0_25, %c0_26] : memref<1x32xf32, #tpu.memory_space<vmem>>, vector<1x32xf32>
      tpu.vector_store %arg6[%c0_25, %c0_26], %54 {strides = array<i32>} : memref<1x32xf32, #tpu.memory_space<vmem>>, vector<1x32xf32>,
    } else {
    }
    %c0 = arith.constant 0 : index
    %c0_1 = arith.constant 0 : index
    %3 = vector.load %arg1[%c0, %c0_1] : memref<2x32xf32, #tpu.memory_space<vmem>>, vector<2x32xf32>
    %c0_2 = arith.constant 0 : index
    %c0_3 = arith.constant 0 : index
    %4 = vector.load %arg2[%c0_2, %c0_3] : memref<2x32xf32, #tpu.memory_space<vmem>>, vector<2x32xf32>
    %cst = arith.constant 6.66666651 : f32
    %5 = vector.broadcast %cst : f32 to vector<2x32xf32>
    %6 = arith.mulf %3, %5 : vector<2x32xf32>
    %cst_4 = arith.constant 6.66666651 : f32
    %7 = vector.broadcast %cst_4 : f32 to vector<2x32xf32>
    %8 = arith.mulf %4, %7 : vector<2x32xf32>
    %cst_5 = arith.constant dense<0xFF800000> : vector<2xf32>
    %9 = vector.multi_reduction <maximumf>, %6, %cst_5 [1] : vector<2x32xf32> to vector<2xf32>
    %10 = vector.shape_cast %9 : vector<2xf32> to vector<2x1xf32>
    %11 = vector.broadcast %10 : vector<2x1xf32> to vector<2x32xf32>
    %12 = arith.subf %6, %11 : vector<2x32xf32>
    %13 = math.exp %12 : vector<2x32xf32>
    %cst_6 = arith.constant dense<0.000000e+00> : vector<2xf32>
    %14 = vector.multi_reduction <add>, %13, %cst_6 [1] : vector<2x32xf32> to vector<2xf32>
    %15 = vector.shape_cast %14 : vector<2xf32> to vector<2x1xf32>
    %16 = vector.broadcast %10 : vector<2x1xf32> to vector<2x32xf32>
    %17 = arith.subf %6, %16 : vector<2x32xf32>
    %18 = math.log %15 : vector<2x1xf32>
    %19 = vector.broadcast %18 : vector<2x1xf32> to vector<2x32xf32>
    %20 = arith.subf %17, %19 : vector<2x32xf32>
    %21 = vector.broadcast %15 : vector<2x1xf32> to vector<2x32xf32>
    %22 = arith.divf %13, %21 : vector<2x32xf32>
    %cst_7 = arith.constant dense<0xFF800000> : vector<2xf32>
    %23 = vector.multi_reduction <maximumf>, %8, %cst_7 [1] : vector<2x32xf32> to vector<2xf32>
    %24 = vector.shape_cast %23 : vector<2xf32> to vector<2x1xf32>
    %25 = vector.broadcast %24 : vector<2x1xf32> to vector<2x32xf32>
    %26 = arith.subf %8, %25 : vector<2x32xf32>
    %27 = math.exp %26 : vector<2x32xf32>
    %cst_8 = arith.constant dense<0.000000e+00> : vector<2xf32>
    %28 = vector.multi_reduction <add>, %27, %cst_8 [1] : vector<2x32xf32> to vector<2xf32>
    %29 = vector.shape_cast %28 : vector<2xf32> to vector<2x1xf32>
    %30 = vector.broadcast %24 : vector<2x1xf32> to vector<2x32xf32>
    %31 = arith.subf %8, %30 : vector<2x32xf32>
    %32 = math.log %29 : vector<2x1xf32>
    %33 = vector.broadcast %32 : vector<2x1xf32> to vector<2x32xf32>
    %34 = arith.subf %31, %33 : vector<2x32xf32>
    %35 = arith.subf %20, %34 : vector<2x32xf32>
    %36 = arith.mulf %22, %35 : vector<2x32xf32>
    %37 = arith.subf %4, %3 : vector<2x32xf32>
    %38 = math.absf %37 : vector<2x32xf32>
    %c0_9 = arith.constant 0 : index
    %c0_10 = arith.constant 0 : index
    %39 = vector.load %arg5[%c0_9, %c0_10] : memref<1x32xf32, #tpu.memory_space<vmem>>, vector<1x32xf32>
    %cst_11 = arith.constant dense<0.000000e+00> : vector<32xf32>
    %40 = vector.multi_reduction <add>, %36, %cst_11 [0] : vector<2x32xf32> to vector<32xf32>
    %41 = vector.shape_cast %40 : vector<32xf32> to vector<1x32xf32>
    %42 = arith.addf %39, %41 : vector<1x32xf32>
    %c0_12 = arith.constant 0 : index
    %c0_13 = arith.constant 0 : index
    %43 = vector.load %arg5[%c0_12, %c0_13] : memref<1x32xf32, #tpu.memory_space<vmem>>, vector<1x32xf32>
    tpu.vector_store %arg5[%c0_12, %c0_13], %42 {strides = array<i32>} : memref<1x32xf32, #tpu.memory_space<vmem>>, vector<1x32xf32>,
    %c0_14 = arith.constant 0 : index
    %c0_15 = arith.constant 0 : index
    %44 = vector.load %arg6[%c0_14, %c0_15] : memref<1x32xf32, #tpu.memory_space<vmem>>, vector<1x32xf32>
    %cst_16 = arith.constant dense<0.000000e+00> : vector<32xf32>
    %45 = vector.multi_reduction <add>, %38, %cst_16 [0] : vector<2x32xf32> to vector<32xf32>
    %46 = vector.shape_cast %45 : vector<32xf32> to vector<1x32xf32>
    %47 = arith.addf %44, %46 : vector<1x32xf32>
    %c0_17 = arith.constant 0 : index
    %c0_18 = arith.constant 0 : index
    %48 = vector.load %arg6[%c0_17, %c0_18] : memref<1x32xf32, #tpu.memory_space<vmem>>, vector<1x32xf32>
    tpu.vector_store %arg6[%c0_17, %c0_18], %47 {strides = array<i32>} : memref<1x32xf32, #tpu.memory_space<vmem>>, vector<1x32xf32>,
    %c0_i32_19 = arith.constant 0 : i32
    %49 = arith.cmpi eq, %arg0, %c0_i32_19 : i32
    %50 = arith.extui %49 : i1 to i32
    %c0_i32_20 = arith.constant 0 : i32
    %51 = arith.cmpi ne, %50, %c0_i32_20 : i32
    scf.if %51 {
      %c0_21 = arith.constant 0 : index
      %c0_22 = arith.constant 0 : index
      %52 = vector.load %arg5[%c0_21, %c0_22] : memref<1x32xf32, #tpu.memory_space<vmem>>, vector<1x32xf32>
      %53 = vector.shape_cast %52 : vector<1x32xf32> to vector<1x1x32xf32>
      %cst_23 = arith.constant dense<0.000000e+00> : vector<1xf32>
      %54 = vector.multi_reduction <add>, %53, %cst_23 [1, 2] : vector<1x1x32xf32> to vector<1xf32>
      %55 = vector.shape_cast %54 : vector<1xf32> to vector<1x1x1xf32>
      %56 = vector.extract %55[0, 0, 0] : f32 from vector<1x1x1xf32>
      %c0_24 = arith.constant 0 : index
      %c0_25 = arith.constant 0 : index
      %57 = memref.load %arg3[%c0_24, %c0_25] : memref<1x1xf32, #tpu.memory_space<smem>>
      memref.store %56, %arg3[%c0_24, %c0_25] : memref<1x1xf32, #tpu.memory_space<smem>>
      %c0_26 = arith.constant 0 : index
      %c0_27 = arith.constant 0 : index
      %58 = vector.load %arg6[%c0_26, %c0_27] : memref<1x32xf32, #tpu.memory_space<vmem>>, vector<1x32xf32>
      %59 = vector.shape_cast %58 : vector<1x32xf32> to vector<1x1x32xf32>
      %cst_28 = arith.constant dense<0.000000e+00> : vector<1xf32>
      %60 = vector.multi_reduction <add>, %59, %cst_28 [1, 2] : vector<1x1x32xf32> to vector<1xf32>
      %61 = vector.shape_cast %60 : vector<1xf32> to vector<1x1x1xf32>
      %62 = vector.extract %61[0, 0, 0] : f32 from vector<1x1x1xf32>
      %c0_29 = arith.constant 0 : index
      %c0_30 = arith.constant 0 : index
      %63 = memref.load %arg4[%c0_29, %c0_30] : memref<1x1xf32, #tpu.memory_space<smem>>
      memref.store %62, %arg4[%c0_29, %c0_30] : memref<1x1xf32, #tpu.memory_space<smem>>
    } else {
    }
    return
  }
  func.func @transform_0(%arg0: i32) -> (i32, i32) {
    %c0_i32 = arith.constant 0 : i32
    %c0_i32_0 = arith.constant 0 : i32
    return %arg0, %c0_i32 : i32, i32
  }
  func.func @transform_1(%arg0: i32) -> (i32, i32) {
    %c0_i32 = arith.constant 0 : i32
    %c0_i32_0 = arith.constant 0 : i32
    return %arg0, %c0_i32 : i32, i32
  }
  func.func @transform_2(%arg0: i32) -> (i32, i32) {
    %c0_i32 = arith.constant 0 : i32
    %c0_i32_0 = arith.constant 0 : i32
    %c0_i32_1 = arith.constant 0 : i32
    return %c0_i32, %c0_i32_0 : i32, i32
  }
  func.func @transform_3(%arg0: i32) -> (i32, i32) {
    %c0_i32 = arith.constant 0 : i32
    %c0_i32_0 = arith.constant 0 : i32
    %c0_i32_1 = arith.constant 0 : i32
    return %c0_i32, %c0_i32_0 : i32, i32
  }
}

</mosaic_0001>

<llo_original>
// kernel: _kd_partial_sums.1
$region0: #{_kd_partial_sums.1}
  #allocation0 [shape = 'u32[]', space=smem, size = 0x4, offset = 0x4, fixed_abs, tag = 'smem constant byte address 0x4 - core index']
  #allocation1 [shape = 'u32[144,128]{1,0:T(1,128)}', space=vmem, size = 0x12000, scoped, tag = 'internal scratch']
  #allocation2 [shape = 'f32[1,32]{1,0:T(1,128)}', space=vmem, size = 0x200, scoped, tag = 'scratch operand']
  #allocation3 [shape = 'f32[1,32]{1,0:T(1,128)}', space=vmem, size = 0x200, scoped, tag = 'scratch operand']
  %s0 = inlined_call_operand.hbm [shape: f32[2,32], index: 0, kind: input, shape index: {}]
  %s1 = inlined_call_operand.vmem [shape: f32[2,32], index: 1, kind: input, shape index: {}]
  %s2 = inlined_call_operand.hbm [shape: f32[1,1], index: 2, kind: output, shape index: {0}]
  %s3 = inlined_call_operand.hbm [shape: f32[1,1], index: 3, kind: output, shape index: {1}]
  %4 = xla_tuple %s2, %s3
  %s5 = sld [smem:[#allocation0]]
  $region38: #{_kd_partial_sums.1} parent=0
    _
  %s7 = ssub.s32 1, %s5
  %s8 = scalar_select 0, %s7, %s5
  $region1: #{_kd_partial_sums.1} parent=0
    #allocation4 [shape = 'u8[1024]{0}', space=vmem, size = 0x400, scoped, tag = 'input window, operand 0, single buffered']
    #allocation5 [shape = 's32[1]{0}', space=sflag, size = 0x4, scoped, tag = 'scoped memory for _kd_partial_sums.1']
    #allocation6 [shape = 's32[1]{0}', space=sflag, size = 0x4, scoped, tag = 'scoped memory for _kd_partial_sums.1']
    #allocation7 [shape = 'u8[512]{0}', space=smem, size = 0x200, scoped, tag = 'output window, operand 0, single buffered']
    #allocation8 [shape = 'u8[512]{0}', space=smem, size = 0x200, scoped, tag = 'output window, operand 1, single buffered']
    #allocation9 [shape = 's32[1]{0}', space=sflag, size = 0x4, scoped, tag = 'scoped memory for _kd_partial_sums.1']
    %9 = vsyncpa [#allocation5], 0
    %10 = vsyncpa [#allocation6], 0
    %11 = vsyncpa [#allocation9], 0
    // Predicated region
    $region2: #{_kd_partial_sums.1} parent=1 // pred_check
      _
    $region3: #{_kd_partial_sums.1} parent=1 // pred_check_branch
      %13 = sbr.rel (0) target = $region5
    $region4: #{_kd_partial_sums.1} parent=1 // pred_region
      %s15 = ssub.s32 32, 32
      %16 = vsyncadd [#allocation5], %s15
      %s18 = sshll.u32 [#allocation4], 4
      %s19 = int_to_ptr.vmem [resolvable:$true] %s18
      %21 = dma.hbm_to_vmem [thread:$0]  %s0, 32, %s19, [#allocation5]
    $region5: #{_kd_partial_sums.1} parent=1 // pred_fallthru
      _
    // Predicated region
    $region6: #{_kd_partial_sums.1} parent=1 // pred_check
      _
    $region7: #{_kd_partial_sums.1} parent=1 // pred_check_branch
      %23 = sbr.rel (0) target = $region9
    $region8: #{_kd_partial_sums.1} parent=1 // pred_region
      _
    $region9: #{_kd_partial_sums.1} parent=1 // pred_fallthru
      _
    // Predicated region
    $region10: #{_kd_partial_sums.1} parent=1 // pred_check
      _
    $region11: #{_kd_partial_sums.1} parent=1 // pred_check_branch
      %25 = sbr.rel (0) target = $region13
    $region12: #{_kd_partial_sums.1} parent=1 // pred_region
      %26 = dma.done [#allocation5], 32
    $region13: #{_kd_partial_sums.1} parent=1 // pred_fallthru
      _
    %p27 = scmp.eq.s32.totalorder 0, 0
    // Predicated region
    $region14: #{_kd_partial_sums.1} parent=1 // pred_check
      %p28 = pneg %p27
    $region15: #{_kd_partial_sums.1} parent=1 // pred_check_branch
      %30 = sbr.rel (%p28) target = $region17
    $region16: #{_kd_partial_sums.1} parent=1 // pred_region
      %vm31 = vcmask 253952
      %32 = vst.msk [vmem:[#allocation2] sm:$0x1] %vm31, 0.0
      %33 = vst.msk [vmem:[#allocation3] sm:$0x1] %vm31, 0.0
    $region17: #{_kd_partial_sums.1} parent=1 // pred_fallthru
      _
    %v34 = vld [vmem:[#allocation4] sm:$0x3]
    %v35 = vld [vmem:[%s1] sm:$0x3]
    %v36 = vmul.f32 %v34, 6.6666665
    %v37 = vmul.f32 %v35, 6.6666665
    %vm38 = vcmask 254976
    %v39 = vsel %vm38, %v36, -inf
    %40 = vmax.xlane.f32.xlu0 %v39
    %v41 = vpop.xlane.xlu0 %40
    %v42 = vsub.f32 %v36, %v41
    %v43 = vmul.f32 %v42, 1.442695
    %v44 = vpow.pop %v43
    %v45 = vsel %vm38, %v44, 0.0
    %46 = vadd.xlane.f32.xlu0 %v45
    %v47 = vpop.xlane.xlu0 %46
    %v48 = vlog2.pop %v47
    %v49 = vmul.f32 %v48, 0.6931472
    %v50 = vsub.f32 %v42, %v49
    %v51 = vrcp.pop %v47
    %v52 = vmul.f32 %v44, %v51
    %v53 = vsel %vm38, %v37, -inf
    %54 = vmax.xlane.f32.xlu0 %v53
    %v55 = vpop.xlane.xlu0 %54
    %v56 = vsub.f32 %v37, %v55
    %v57 = vmul.f32 %v56, 1.442695
    %v58 = vpow.pop %v57
    %v59 = vsel %vm38, %v58, 0.0
    %60 = vadd.xlane.f32.xlu0 %v59
    %v61 = vpop.xlane.xlu0 %60
    %v62 = vlog2.pop %v61
    %v63 = vmul.f32 %v62, 0.6931472
    %v64 = vsub.f32 %v56, %v63
    %v65 = vsub.f32 %v50, %v64
    %v66 = vmul.f32 %v52, %v65
    %v67 = vsub.f32 %v35, %v34
    %v68 = vand.u32 2147483647, %v67
    %v69 = vld [vmem:[#allocation2] sm:$0x1]
    %v70 = vsel %vm38, %v66, 0.0
    %v71 = vrot.slane %v70, 4
    %v72 = vadd.f32 %v70, %v71
    %v73 = vrot.slane %v72, 2
    %v74 = vadd.f32 %v72, %v73
    %v75 = vrot.slane %v74, 1
    %v76 = vadd.f32 %v74, %v75
    %v77 = vadd.f32 %v69, %v76
    %vm78 = vcmask 253952
    %79 = vst.msk [vmem:[#allocation2] sm:$0x1] %vm78, %v77
    %v80 = vld [vmem:[#allocation3] sm:$0x1]
    %v81 = vsel %vm38, %v68, 0.0
    %v82 = vrot.slane %v81, 4
    %v83 = vadd.f32 %v81, %v82
    %v84 = vrot.slane %v83, 2
    %v85 = vadd.f32 %v83, %v84
    %v86 = vrot.slane %v85, 1
    %v87 = vadd.f32 %v85, %v86
    %v88 = vadd.f32 %v80, %v87
    %89 = vst.msk [vmem:[#allocation3] sm:$0x1] %vm78, %v88
    // Predicated region
    $region18: #{_kd_partial_sums.1} parent=1 // pred_check
      %p90 = pneg %p27
    $region19: #{_kd_partial_sums.1} parent=1 // pred_check_branch
      %92 = sbr.rel (%p90) target = $region21
    $region20: #{_kd_partial_sums.1} parent=1 // pred_region
      %v93 = vld [vmem:[#allocation2] sm:$0x1]
      %v94 = vsel %vm78, %v93, 0.0
      %95 = vadd.xlane.f32.xlu0 %v94
      %v96 = vpop.xlane.xlu0 %95
      %v97 = vrot.slane %v96, 4
      %v98 = vadd.f32 %v96, %v97
      %v99 = vrot.slane %v98, 2
      %v100 = vadd.f32 %v98, %v99
      %v101 = vrot.slane %v100, 1
      %v102 = vadd.f32 %v100, %v101
      %s103 = vtos %v102
      %s104 = scalar_lea.smem [#allocation7], 0
      %105 = sst [smem:[%s104]] %s103
      %v106 = vld [vmem:[#allocation3] sm:$0x1]
      %v107 = vsel %vm78, %v106, 0.0
      %108 = vadd.xlane.f32.xlu0 %v107
      %v109 = vpop.xlane.xlu0 %108
      %v110 = vrot.slane %v109, 4
      %v111 = vadd.f32 %v109, %v110
      %v112 = vrot.slane %v111, 2
      %v113 = vadd.f32 %v111, %v112
      %v114 = vrot.slane %v113, 1
      %v115 = vadd.f32 %v113, %v114
      %s116 = vtos %v115
      %s117 = scalar_lea.smem [#allocation8], 0
      %118 = sst [smem:[%s117]] %s116
    $region21: #{_kd_partial_sums.1} parent=1 // pred_fallthru
      _
    // Predicated region
    $region22: #{_kd_partial_sums.1} parent=1 // pred_check
      _
    $region23: #{_kd_partial_sums.1} parent=1 // pred_check_branch
      %120 = sbr.rel (0) target = $region25
    $region24: #{_kd_partial_sums.1} parent=1 // pred_region
      %s122 = ssub.s32 16, 16
      %123 = vsyncadd [#allocation6], %s122
      %126 = dma.smem_to_hbm [#allocation7], 16, %s2, [#allocation6]
    $region25: #{_kd_partial_sums.1} parent=1 // pred_fallthru
      _
    // Predicated region
    $region26: #{_kd_partial_sums.1} parent=1 // pred_check
      _
    $region27: #{_kd_partial_sums.1} parent=1 // pred_check_branch
      %128 = sbr.rel (0) target = $region29
    $region28: #{_kd_partial_sums.1} parent=1 // pred_region
      %s130 = ssub.s32 16, 16
      %131 = vsyncadd [#allocation9], %s130
      %134 = dma.smem_to_hbm [#allocation8], 16, %s3, [#allocation9]
    $region29: #{_kd_partial_sums.1} parent=1 // pred_fallthru
      _
    // Predicated region
    $region30: #{_kd_partial_sums.1} parent=1 // pred_check
      _
    $region31: #{_kd_partial_sums.1} parent=1 // pred_check_branch
      %136 = sbr.rel (0) target = $region33
    $region32: #{_kd_partial_sums.1} parent=1 // pred_region
      %137 = dma.done [#allocation6], 16
    $region33: #{_kd_partial_sums.1} parent=1 // pred_fallthru
      _
    // Predicated region
    $region34: #{_kd_partial_sums.1} parent=1 // pred_check
      _
    $region35: #{_kd_partial_sums.1} parent=1 // pred_check_branch
      %139 = sbr.rel (0) target = $region37
    $region36: #{_kd_partial_sums.1} parent=1 // pred_region
      %140 = dma.done [#allocation9], 16
    $region37: #{_kd_partial_sums.1} parent=1 // pred_fallthru
      _
    %141 = sfence
    %142 = vsyncpa [#allocation5], 1
    %143 = vsyncpa [#allocation6], 1
    %144 = vsyncpa [#allocation9], 1

</llo_original>
